<compile_context>
chip_gen: v7x
topology: tpu7x:2x2x1
jax: 0.10.0
libtpu: 0.0.40
codegen_flags: <defaults>
</compile_context>

<pallas_src>
import functools

import jax
import jax.numpy as jnp
import numpy as np
from jax.experimental import pallas as pl
from jax.experimental.pallas import tpu as pltpu

EPS = 1e-5


def _resblock_kernel(inv_n, matmul_dtype,
                     x_ref, lmask_ref, rmask_ref, vmask_ref,
                     w1_ref, b1_ref, g1_ref, be1_ref,
                     w2_ref, b2_ref, g2_ref, be2_ref,
                     o_ref):
    """Fused residual block. All refs are VMEM.

    x_ref     : (C_pad, W_pad) f32   channels x (batch-major flattened length)
    lmask_ref : (1, W_pad) f32       1 where the left  neighbour is in-sequence
    rmask_ref : (1, W_pad) f32       1 where the right neighbour is in-sequence
    vmask_ref : (1, W_pad) f32       1 on real (non lane-pad) columns
    w*_ref    : (3, C_pad, C_pad)    conv weights, tap-major (w[k] == torch_w[:, :, k])
    b*,g*,be* : (C_pad, 1) f32       conv bias / BN gamma / BN beta
    o_ref     : (C_pad, W_pad) f32   output slab (padded rows/cols hold garbage)
    """
    W = x_ref.shape[1]
    lm = lmask_ref[...]
    rm = rmask_ref[...]
    vm = vmask_ref[...]

    def conv3(src, w_ref, b_ref):
        # Output column c needs  w[0]@src[:,c-1] + w[1]@src[:,c] + w[2]@src[:,c+1].
        # Three slab-wide matmuls (MXU), then lane-rotate tap 0/2 (XLU) and mask
        # the columns whose neighbour crosses a sequence boundary (== Conv1d's
        # zero padding) or the slab edge.
        s = src.astype(matmul_dtype)
        y0 = jnp.dot(w_ref[0], s, preferred_element_type=jnp.float32)
        y1 = jnp.dot(w_ref[1], s, preferred_element_type=jnp.float32)
        y2 = jnp.dot(w_ref[2], s, preferred_element_type=jnp.float32)
        y0 = pltpu.roll(y0, 1, axis=1) * lm        # y0'[:, c] = y0[:, c-1]
        y2 = pltpu.roll(y2, W - 1, axis=1) * rm    # y2'[:, c] = y2[:, c+1]
        return y0 + y1 + y2 + b_ref[...]

    def batchnorm(y, g_ref, be_ref):
        # Training-mode BN over (batch, length) == lane axis, biased variance.
        # Single fused pass: masked sum + sum-of-squares per channel.
        ym = y * vm
        s1 = jnp.sum(ym, axis=1, keepdims=True)
        s2 = jnp.sum(ym * ym, axis=1, keepdims=True)
        mean = s1 * inv_n
        var = jnp.maximum(s2 * inv_n - mean * mean, 0.0)
        scale = jax.lax.rsqrt(var + EPS) * g_ref[...]     # EUP rsqrt
        return (y - mean) * scale + be_ref[...]

    x = x_ref[...]
    h = jnp.maximum(batchnorm(conv3(x, w1_ref, b1_ref), g1_ref, be1_ref), 0.0)
    z = batchnorm(conv3(h, w2_ref, b2_ref), g2_ref, be2_ref)
    o_ref[...] = jnp.maximum(z + x, 0.0)          # residual add + ReLU, lane-dense


def residual_block(x, params, *, matmul_dtype=jnp.float32):
    """x: (B, C, L) float32, PyTorch NCL layout. Returns (B, C, L) float32.

    matmul_dtype: dtype of the MXU conv operands (bfloat16 pays off on v6e/v7x;
    keep float32 on v5e or when exact f32 parity is required, as in the test).
    """
    B, C, L = x.shape
    W = B * L
    C_pad = ((C + 7) // 8) * 8            # sublane multiple of 8
    W_pad = ((W + 127) // 128) * 128      # lane multiple of 128

    # Channels-major dense slab (C, B*L), zero padded to the aligned shape.
    x2d = jnp.transpose(x, (1, 0, 2)).reshape(C, W).astype(jnp.float32)
    x2d = jnp.pad(x2d, ((0, C_pad - C), (0, W_pad - W)))

    # Hoisted boundary / validity masks (computed once, outside the kernel).
    col = jnp.arange(W_pad, dtype=jnp.int32)[None, :]
    pos = col % L
    lmask = (pos != 0).astype(jnp.float32)
    rmask = (pos != (L - 1)).astype(jnp.float32)
    vmask = (col < W).astype(jnp.float32)

    def pad_w(w):   # torch (C_out, C_in, 3) -> tap-major (3, C_pad, C_pad)
        wt = jnp.transpose(w, (2, 0, 1)).astype(jnp.float32)
        wt = jnp.pad(wt, ((0, 0), (0, C_pad - C), (0, C_pad - C)))
        return wt.astype(matmul_dtype)

    def pad_col(v, fill=0.0):   # (C,) -> (C_pad, 1)
        return jnp.pad(v.astype(jnp.float32), (0, C_pad - C),
                       constant_values=fill).reshape(C_pad, 1)

    kernel = functools.partial(_resblock_kernel, 1.0 / float(W),
                               jnp.dtype(matmul_dtype))
    vmem = pl.BlockSpec(memory_space=pltpu.MemorySpace.VMEM)

    out2d = pl.pallas_call(
        kernel,
        out_shape=jax.ShapeDtypeStruct((C_pad, W_pad), jnp.float32),
        in_specs=[vmem] * 12,
        out_specs=vmem,
    )(x2d, lmask, rmask, vmask,
      pad_w(params["w1"]), pad_col(params["b1"]),
      pad_col(params["g1"], 1.0), pad_col(params["be1"]),
      pad_w(params["w2"]), pad_col(params["b2"]),
      pad_col(params["g2"], 1.0), pad_col(params["be2"]))

    out = out2d[:C, :W].reshape(C, B, L)
    return jnp.transpose(out, (1, 0, 2))


def reference_forward(x, p):
    """Pure-JAX reference matching PyTorch ResidualBlock.forward (training-mode BN)."""
    def conv(x, w, b):
        L = x.shape[-1]
        xp = jnp.pad(x, ((0, 0), (0, 0), (1, 1)))
        acc = sum(jnp.einsum("oi,bil->bol", w[:, :, k], xp[:, :, k:k + L])
                  for k in range(3))
        return acc + b[None, :, None]

    def bn(y, g, be):
        m = jnp.mean(y, axis=(0, 2), keepdims=True)
        v = jnp.mean((y - m) ** 2, axis=(0, 2), keepdims=True)
        return (y - m) * jax.lax.rsqrt(v + EPS) * g[None, :, None] + be[None, :, None]

    h = jax.nn.relu(bn(conv(x, p["w1"], p["b1"]), p["g1"], p["be1"]))
    y = bn(conv(h, p["w2"], p["b2"]), p["g2"], p["be2"]) + x
    return jax.nn.relu(y)


def init_params(key, channels):
    """Deterministic init mirroring nn.Conv1d / nn.BatchNorm1d shapes."""
    ks = jax.random.split(key, 6)
    fan_in = channels * 3
    bound = 1.0 / np.sqrt(fan_in)
    u = lambda k, shape: jax.random.uniform(k, shape, jnp.float32, -bound, bound)
    return {
        "w1": u(ks[0], (channels, channels, 3)),
        "b1": u(ks[1], (channels,)),
        "w2": u(ks[2], (channels, channels, 3)),
        "b2": u(ks[3], (channels,)),
        "g1": 1.0 + 0.1 * jax.random.normal(ks[4], (channels,), jnp.float32),
        "be1": jnp.zeros((channels,), jnp.float32),
        "g2": 1.0 + 0.1 * jax.random.normal(ks[5], (channels,), jnp.float32),
        "be2": jnp.zeros((channels,), jnp.float32),
    }


if __name__ == "__main__":
    B, C, L = 2, 4, 16
    key = jax.random.PRNGKey(0)
    kx, kp = jax.random.split(key)
    x = jax.random.normal(kx, (B, C, L), jnp.float32)
    params = init_params(kp, C)

    out = jax.jit(residual_block)(x, params)
    out = jax.block_until_ready(out)

    ref = reference_forward(x, params)
    assert out.shape == (B, C, L)
    np.testing.assert_allclose(np.asarray(out), np.asarray(ref), rtol=1e-4, atol=1e-4)

    print("KERNEL_OK")
</pallas_src>

<mosaic_0001>
module attributes {stable_mosaic.version = 11 : i64} {
  func.func @_resblock_kernel(%arg0: memref<8x128xf32, #tpu.memory_space<vmem>>, %arg1: memref<1x128xf32, #tpu.memory_space<vmem>>, %arg2: memref<1x128xf32, #tpu.memory_space<vmem>>, %arg3: memref<1x128xf32, #tpu.memory_space<vmem>>, %arg4: memref<3x8x8xf32, #tpu.memory_space<vmem>>, %arg5: memref<8x1xf32, #tpu.memory_space<vmem>>, %arg6: memref<8x1xf32, #tpu.memory_space<vmem>>, %arg7: memref<8x1xf32, #tpu.memory_space<vmem>>, %arg8: memref<3x8x8xf32, #tpu.memory_space<vmem>>, %arg9: memref<8x1xf32, #tpu.memory_space<vmem>>, %arg10: memref<8x1xf32, #tpu.memory_space<vmem>>, %arg11: memref<8x1xf32, #tpu.memory_space<vmem>>, %arg12: memref<8x128xf32, #tpu.memory_space<vmem>>) attributes {dimension_semantics = [], scalar_prefetch = 0 : i64, scratch_operands = 0 : i64, tpu.core_type = #tpu.core_type<tc>} {
    %c0 = arith.constant 0 : index
    %c0_0 = arith.constant 0 : index
    %0 = vector.load %arg1[%c0, %c0_0] : memref<1x128xf32, #tpu.memory_space<vmem>>, vector<1x128xf32>
    %c0_1 = arith.constant 0 : index
    %c0_2 = arith.constant 0 : index
    %1 = vector.load %arg2[%c0_1, %c0_2] : memref<1x128xf32, #tpu.memory_space<vmem>>, vector<1x128xf32>
    %c0_3 = arith.constant 0 : index
    %c0_4 = arith.constant 0 : index
    %2 = vector.load %arg3[%c0_3, %c0_4] : memref<1x128xf32, #tpu.memory_space<vmem>>, vector<1x128xf32>
    %c0_5 = arith.constant 0 : index
    %c0_6 = arith.constant 0 : index
    %3 = vector.load %arg0[%c0_5, %c0_6] : memref<8x128xf32, #tpu.memory_space<vmem>>, vector<8x128xf32>
    %c0_7 = arith.constant 0 : index
    %c0_8 = arith.constant 0 : index
    %c0_9 = arith.constant 0 : index
    %4 = vector.load %arg4[%c0_7, %c0_8, %c0_9] : memref<3x8x8xf32, #tpu.memory_space<vmem>>, vector<1x8x8xf32>
    %5 = vector.shape_cast %4 : vector<1x8x8xf32> to vector<8x8xf32>
    %cst = arith.constant dense<0.000000e+00> : vector<8x128xf32>
    %6 = tpu.matmul %5, %3, %cst {dimension_numbers = #tpu.dot_dimension_numbers<[1], [0], [0], [1], [0, 0, 1, 1], [], []>} : vector<8x8xf32>, vector<8x128xf32>, vector<8x128xf32> -> vector<8x128xf32>
    %c1 = arith.constant 1 : index
    %c0_10 = arith.constant 0 : index
    %c0_11 = arith.constant 0 : index
    %7 = vector.load %arg4[%c1, %c0_10, %c0_11] : memref<3x8x8xf32, #tpu.memory_space<vmem>>, vector<1x8x8xf32>
    %8 = vector.shape_cast %7 : vector<1x8x8xf32> to vector<8x8xf32>
    %cst_12 = arith.constant dense<0.000000e+00> : vector<8x128xf32>
    %9 = tpu.matmul %8, %3, %cst_12 {dimension_numbers = #tpu.dot_dimension_numbers<[1], [0], [0], [1], [0, 0, 1, 1], [], []>} : vector<8x8xf32>, vector<8x128xf32>, vector<8x128xf32> -> vector<8x128xf32>
    %c2 = arith.constant 2 : index
    %c0_13 = arith.constant 0 : index
    %c0_14 = arith.constant 0 : index
    %10 = vector.load %arg4[%c2, %c0_13, %c0_14] : memref<3x8x8xf32, #tpu.memory_space<vmem>>, vector<1x8x8xf32>
    %11 = vector.shape_cast %10 : vector<1x8x8xf32> to vector<8x8xf32>
    %cst_15 = arith.constant dense<0.000000e+00> : vector<8x128xf32>
    %12 = tpu.matmul %11, %3, %cst_15 {dimension_numbers = #tpu.dot_dimension_numbers<[1], [0], [0], [1], [0, 0, 1, 1], [], []>} : vector<8x8xf32>, vector<8x128xf32>, vector<8x128xf32> -> vector<8x128xf32>
    %c1_i32 = arith.constant 1 : i32
    %13 = tpu.dynamic_rotate %6 by %c1_i32 dim 1 : vector<8x128xf32>, i32 -> vector<8x128xf32>
    %14 = vector.broadcast %0 : vector<1x128xf32> to vector<8x128xf32>
    %15 = arith.mulf %13, %14 : vector<8x128xf32>
    %c127_i32 = arith.constant 127 : i32
    %16 = tpu.dynamic_rotate %12 by %c127_i32 dim 1 : vector<8x128xf32>, i32 -> vector<8x128xf32>
    %17 = vector.broadcast %1 : vector<1x128xf32> to vector<8x128xf32>
    %18 = arith.mulf %16, %17 : vector<8x128xf32>
    %19 = arith.addf %15, %9 : vector<8x128xf32>
    %20 = arith.addf %19, %18 : vector<8x128xf32>
    %c0_16 = arith.constant 0 : index
    %c0_17 = arith.constant 0 : index
    %21 = vector.load %arg5[%c0_16, %c0_17] : memref<8x1xf32, #tpu.memory_space<vmem>>, vector<8x1xf32>
    %22 = vector.broadcast %21 : vector<8x1xf32> to vector<8x128xf32>
    %23 = arith.addf %20, %22 : vector<8x128xf32>
    %24 = vector.broadcast %2 : vector<1x128xf32> to vector<8x128xf32>
    %25 = arith.mulf %23, %24 : vector<8x128xf32>
    %cst_18 = arith.constant dense<0.000000e+00> : vector<8xf32>
    %26 = vector.multi_reduction <add>, %25, %cst_18 [1] : vector<8x128xf32> to vector<8xf32>
    %27 = vector.shape_cast %26 : vector<8xf32> to vector<8x1xf32>
    %28 = arith.mulf %25, %25 : vector<8x128xf32>
    %cst_19 = arith.constant dense<0.000000e+00> : vector<8xf32>
    %29 = vector.multi_reduction <add>, %28, %cst_19 [1] : vector<8x128xf32> to vector<8xf32>
    %30 = vector.shape_cast %29 : vector<8xf32> to vector<8x1xf32>
    %cst_20 = arith.constant 3.125000e-02 : f32
    %31 = vector.broadcast %cst_20 : f32 to vector<8x1xf32>
    %32 = arith.mulf %27, %31 : vector<8x1xf32>
    %cst_21 = arith.constant 3.125000e-02 : f32
    %33 = vector.broadcast %cst_21 : f32 to vector<8x1xf32>
    %34 = arith.mulf %30, %33 : vector<8x1xf32>
    %35 = arith.mulf %32, %32 : vector<8x1xf32>
    %36 = arith.subf %34, %35 : vector<8x1xf32>
    %cst_22 = arith.constant 0.000000e+00 : f32
    %37 = vector.broadcast %cst_22 : f32 to vector<8x1xf32>
    %38 = arith.maximumf %36, %37 : vector<8x1xf32>
    %cst_23 = arith.constant 9.99999974E-6 : f32
    %39 = vector.broadcast %cst_23 : f32 to vector<8x1xf32>
    %40 = arith.addf %38, %39 : vector<8x1xf32>
    %41 = math.rsqrt %40 : vector<8x1xf32>
    %c0_24 = arith.constant 0 : index
    %c0_25 = arith.constant 0 : index
    %42 = vector.load %arg6[%c0_24, %c0_25] : memref<8x1xf32, #tpu.memory_space<vmem>>, vector<8x1xf32>
    %43 = arith.mulf %41, %42 : vector<8x1xf32>
    %44 = vector.broadcast %32 : vector<8x1xf32> to vector<8x128xf32>
    %45 = arith.subf %23, %44 : vector<8x128xf32>
    %46 = vector.broadcast %43 : vector<8x1xf32> to vector<8x128xf32>
    %47 = arith.mulf %45, %46 : vector<8x128xf32>
    %c0_26 = arith.constant 0 : index
    %c0_27 = arith.constant 0 : index
    %48 = vector.load %arg7[%c0_26, %c0_27] : memref<8x1xf32, #tpu.memory_space<vmem>>, vector<8x1xf32>
    %49 = vector.broadcast %48 : vector<8x1xf32> to vector<8x128xf32>
    %50 = arith.addf %47, %49 : vector<8x128xf32>
    %cst_28 = arith.constant 0.000000e+00 : f32
    %51 = vector.broadcast %cst_28 : f32 to vector<8x128xf32>
    %52 = arith.maximumf %50, %51 : vector<8x128xf32>
    %c0_29 = arith.constant 0 : index
    %c0_30 = arith.constant 0 : index
    %c0_31 = arith.constant 0 : index
    %53 = vector.load %arg8[%c0_29, %c0_30, %c0_31] : memref<3x8x8xf32, #tpu.memory_space<vmem>>, vector<1x8x8xf32>
    %54 = vector.shape_cast %53 : vector<1x8x8xf32> to vector<8x8xf32>
    %cst_32 = arith.constant dense<0.000000e+00> : vector<8x128xf32>
    %55 = tpu.matmul %54, %52, %cst_32 {dimension_numbers = #tpu.dot_dimension_numbers<[1], [0], [0], [1], [0, 0, 1, 1], [], []>} : vector<8x8xf32>, vector<8x128xf32>, vector<8x128xf32> -> vector<8x128xf32>
    %c1_33 = arith.constant 1 : index
    %c0_34 = arith.constant 0 : index
    %c0_35 = arith.constant 0 : index
    %56 = vector.load %arg8[%c1_33, %c0_34, %c0_35] : memref<3x8x8xf32, #tpu.memory_space<vmem>>, vector<1x8x8xf32>
    %57 = vector.shape_cast %56 : vector<1x8x8xf32> to vector<8x8xf32>
    %cst_36 = arith.constant dense<0.000000e+00> : vector<8x128xf32>
    %58 = tpu.matmul %57, %52, %cst_36 {dimension_numbers = #tpu.dot_dimension_numbers<[1], [0], [0], [1], [0, 0, 1, 1], [], []>} : vector<8x8xf32>, vector<8x128xf32>, vector<8x128xf32> -> vector<8x128xf32>
    %c2_37 = arith.constant 2 : index
    %c0_38 = arith.constant 0 : index
    %c0_39 = arith.constant 0 : index
    %59 = vector.load %arg8[%c2_37, %c0_38, %c0_39] : memref<3x8x8xf32, #tpu.memory_space<vmem>>, vector<1x8x8xf32>
    %60 = vector.shape_cast %59 : vector<1x8x8xf32> to vector<8x8xf32>
    %cst_40 = arith.constant dense<0.000000e+00> : vector<8x128xf32>
    %61 = tpu.matmul %60, %52, %cst_40 {dimension_numbers = #tpu.dot_dimension_numbers<[1], [0], [0], [1], [0, 0, 1, 1], [], []>} : vector<8x8xf32>, vector<8x128xf32>, vector<8x128xf32> -> vector<8x128xf32>
    %c1_i32_41 = arith.constant 1 : i32
    %62 = tpu.dynamic_rotate %55 by %c1_i32_41 dim 1 : vector<8x128xf32>, i32 -> vector<8x128xf32>
    %63 = vector.broadcast %0 : vector<1x128xf32> to vector<8x128xf32>
    %64 = arith.mulf %62, %63 : vector<8x128xf32>
    %c127_i32_42 = arith.constant 127 : i32
    %65 = tpu.dynamic_rotate %61 by %c127_i32_42 dim 1 : vector<8x128xf32>, i32 -> vector<8x128xf32>
    %66 = vector.broadcast %1 : vector<1x128xf32> to vector<8x128xf32>
    %67 = arith.mulf %65, %66 : vector<8x128xf32>
    %68 = arith.addf %64, %58 : vector<8x128xf32>
    %69 = arith.addf %68, %67 : vector<8x128xf32>
    %c0_43 = arith.constant 0 : index
    %c0_44 = arith.constant 0 : index
    %70 = vector.load %arg9[%c0_43, %c0_44] : memref<8x1xf32, #tpu.memory_space<vmem>>, vector<8x1xf32>
    %71 = vector.broadcast %70 : vector<8x1xf32> to vector<8x128xf32>
    %72 = arith.addf %69, %71 : vector<8x128xf32>
    %73 = vector.broadcast %2 : vector<1x128xf32> to vector<8x128xf32>
    %74 = arith.mulf %72, %73 : vector<8x128xf32>
    %cst_45 = arith.constant dense<0.000000e+00> : vector<8xf32>
    %75 = vector.multi_reduction <add>, %74, %cst_45 [1] : vector<8x128xf32> to vector<8xf32>
    %76 = vector.shape_cast %75 : vector<8xf32> to vector<8x1xf32>
    %77 = arith.mulf %74, %74 : vector<8x128xf32>
    %cst_46 = arith.constant dense<0.000000e+00> : vector<8xf32>
    %78 = vector.multi_reduction <add>, %77, %cst_46 [1] : vector<8x128xf32> to vector<8xf32>
    %79 = vector.shape_cast %78 : vector<8xf32> to vector<8x1xf32>
    %cst_47 = arith.constant 3.125000e-02 : f32
    %80 = vector.broadcast %cst_47 : f32 to vector<8x1xf32>
    %81 = arith.mulf %76, %80 : vector<8x1xf32>
    %cst_48 = arith.constant 3.125000e-02 : f32
    %82 = vector.broadcast %cst_48 : f32 to vector<8x1xf32>
    %83 = arith.mulf %79, %82 : vector<8x1xf32>
    %84 = arith.mulf %81, %81 : vector<8x1xf32>
    %85 = arith.subf %83, %84 : vector<8x1xf32>
    %cst_49 = arith.constant 0.000000e+00 : f32
    %86 = vector.broadcast %cst_49 : f32 to vector<8x1xf32>
    %87 = arith.maximumf %85, %86 : vector<8x1xf32>
    %cst_50 = arith.constant 9.99999974E-6 : f32
    %88 = vector.broadcast %cst_50 : f32 to vector<8x1xf32>
    %89 = arith.addf %87, %88 : vector<8x1xf32>
    %90 = math.rsqrt %89 : vector<8x1xf32>
    %c0_51 = arith.constant 0 : index
    %c0_52 = arith.constant 0 : index
    %91 = vector.load %arg10[%c0_51, %c0_52] : memref<8x1xf32, #tpu.memory_space<vmem>>, vector<8x1xf32>
    %92 = arith.mulf %90, %91 : vector<8x1xf32>
    %93 = vector.broadcast %81 : vector<8x1xf32> to vector<8x128xf32>
    %94 = arith.subf %72, %93 : vector<8x128xf32>
    %95 = vector.broadcast %92 : vector<8x1xf32> to vector<8x128xf32>
    %96 = arith.mulf %94, %95 : vector<8x128xf32>
    %c0_53 = arith.constant 0 : index
    %c0_54 = arith.constant 0 : index
    %97 = vector.load %arg11[%c0_53, %c0_54] : memref<8x1xf32, #tpu.memory_space<vmem>>, vector<8x1xf32>
    %98 = vector.broadcast %97 : vector<8x1xf32> to vector<8x128xf32>
    %99 = arith.addf %96, %98 : vector<8x128xf32>
    %100 = arith.addf %99, %3 : vector<8x128xf32>
    %cst_55 = arith.constant 0.000000e+00 : f32
    %101 = vector.broadcast %cst_55 : f32 to vector<8x128xf32>
    %102 = arith.maximumf %100, %101 : vector<8x128xf32>
    %c0_56 = arith.constant 0 : index
    %c0_57 = arith.constant 0 : index
    %103 = vector.load %arg12[%c0_56, %c0_57] : memref<8x128xf32, #tpu.memory_space<vmem>>, vector<8x128xf32>
    tpu.vector_store %arg12[%c0_56, %c0_57], %102 {strides = array<i32>} : memref<8x128xf32, #tpu.memory_space<vmem>>, vector<8x128xf32>,
    return
  }
}

</mosaic_0001>

<llo_original>
// kernel: residual_block.1
$region0: #{residual_block.1}
  #allocation0 [shape = 'u32[]', space=smem, size = 0x4, offset = 0x4, fixed_abs, tag = 'smem constant byte address 0x4 - core index']
  #allocation1 [shape = 'u32[144,128]{1,0:T(1,128)}', space=vmem, size = 0x12000, scoped, tag = 'internal scratch']
  %s0 = inlined_call_operand.vmem [shape: f32[8,128], index: 0, kind: input, shape index: {}]
  %s1 = inlined_call_operand.vmem [shape: f32[1,128], index: 1, kind: input, shape index: {}]
  %s2 = inlined_call_operand.vmem [shape: f32[1,128], index: 2, kind: input, shape index: {}]
  %s3 = inlined_call_operand.vmem [shape: f32[1,128], index: 3, kind: input, shape index: {}]
  %s4 = inlined_call_operand.vmem [shape: f32[3,8,8], index: 4, kind: input, shape index: {}]
  %s5 = inlined_call_operand.vmem [shape: f32[8,1], index: 5, kind: input, shape index: {}]
  %s6 = inlined_call_operand.vmem [shape: f32[8,1], index: 6, kind: input, shape index: {}]
  %s7 = inlined_call_operand.vmem [shape: f32[8,1], index: 7, kind: input, shape index: {}]
  %s8 = inlined_call_operand.vmem [shape: f32[3,8,8], index: 8, kind: input, shape index: {}]
  %s9 = inlined_call_operand.vmem [shape: f32[8,1], index: 9, kind: input, shape index: {}]
  %s10 = inlined_call_operand.vmem [shape: f32[8,1], index: 10, kind: input, shape index: {}]
  %s11 = inlined_call_operand.vmem [shape: f32[8,1], index: 11, kind: input, shape index: {}]
  %s12 = inlined_call_operand.vmem [shape: f32[8,128], index: 12, kind: output, shape index: {}]
  %s13 = sld [smem:[#allocation0]]
  $region58: #{residual_block.1} parent=0
    _
  %s15 = ssub.s32 1, %s13
  %s16 = scalar_select 0, %s15, %s13
  // Predicated region
  $region2: #{residual_block.1} parent=0 // pred_check
    _
  $region3: #{residual_block.1} parent=0 // pred_check_branch
    %18 = sbr.rel (0) target = $region5
  $region4: #{residual_block.1} parent=0 // pred_region
    _
  $region5: #{residual_block.1} parent=0 // pred_fallthru
    _
  // Predicated region
  $region6: #{residual_block.1} parent=0 // pred_check
    _
  $region7: #{residual_block.1} parent=0 // pred_check_branch
    %20 = sbr.rel (0) target = $region9
  $region8: #{residual_block.1} parent=0 // pred_region
    _
  $region9: #{residual_block.1} parent=0 // pred_fallthru
    _
  // Predicated region
  $region10: #{residual_block.1} parent=0 // pred_check
    _
  $region11: #{residual_block.1} parent=0 // pred_check_branch
    %22 = sbr.rel (0) target = $region13
  $region12: #{residual_block.1} parent=0 // pred_region
    _
  $region13: #{residual_block.1} parent=0 // pred_fallthru
    _
  // Predicated region
  $region14: #{residual_block.1} parent=0 // pred_check
    _
  $region15: #{residual_block.1} parent=0 // pred_check_branch
    %24 = sbr.rel (0) target = $region17
  $region16: #{residual_block.1} parent=0 // pred_region
    _
  $region17: #{residual_block.1} parent=0 // pred_fallthru
    _
  // Predicated region
  $region18: #{residual_block.1} parent=0 // pred_check
    _
  $region19: #{residual_block.1} parent=0 // pred_check_branch
    %26 = sbr.rel (0) target = $region21
  $region20: #{residual_block.1} parent=0 // pred_region
    _
  $region21: #{residual_block.1} parent=0 // pred_fallthru
    _
  // Predicated region
  $region22: #{residual_block.1} parent=0 // pred_check
    _
  $region23: #{residual_block.1} parent=0 // pred_check_branch
    %28 = sbr.rel (0) target = $region25
  $region24: #{residual_block.1} parent=0 // pred_region
    _
  $region25: #{residual_block.1} parent=0 // pred_fallthru
    _
  // Predicated region
  $region26: #{residual_block.1} parent=0 // pred_check
    _
  $region27: #{residual_block.1} parent=0 // pred_check_branch
    %30 = sbr.rel (0) target = $region29
  $region28: #{residual_block.1} parent=0 // pred_region
    _
  $region29: #{residual_block.1} parent=0 // pred_fallthru
    _
  // Predicated region
  $region30: #{residual_block.1} parent=0 // pred_check
    _
  $region31: #{residual_block.1} parent=0 // pred_check_branch
    %32 = sbr.rel (0) target = $region33
  $region32: #{residual_block.1} parent=0 // pred_region
    _
  $region33: #{residual_block.1} parent=0 // pred_fallthru
    _
  // Predicated region
  $region34: #{residual_block.1} parent=0 // pred_check
    _
  $region35: #{residual_block.1} parent=0 // pred_check_branch
    %34 = sbr.rel (0) target = $region37
  $region36: #{residual_block.1} parent=0 // pred_region
    _
  $region37: #{residual_block.1} parent=0 // pred_fallthru
    _
  // Predicated region
  $region38: #{residual_block.1} parent=0 // pred_check
    _
  $region39: #{residual_block.1} parent=0 // pred_check_branch
    %36 = sbr.rel (0) target = $region41
  $region40: #{residual_block.1} parent=0 // pred_region
    _
  $region41: #{residual_block.1} parent=0 // pred_fallthru
    _
  // Predicated region
  $region42: #{residual_block.1} parent=0 // pred_check
    _
  $region43: #{residual_block.1} parent=0 // pred_check_branch
    %38 = sbr.rel (0) target = $region45
  $region44: #{residual_block.1} parent=0 // pred_region
    _
  $region45: #{residual_block.1} parent=0 // pred_fallthru
    _
  // Predicated region
  $region46: #{residual_block.1} parent=0 // pred_check
    _
  $region47: #{residual_block.1} parent=0 // pred_check_branch
    %40 = sbr.rel (0) target = $region49
  $region48: #{residual_block.1} parent=0 // pred_region
    _
  $region49: #{residual_block.1} parent=0 // pred_fallthru
    _
  %v41 = vld [vmem:[%s1] sm:$0x1]
  %v42 = vld [vmem:[%s2] sm:$0x1]
  %v43 = vld [vmem:[%s3] sm:$0x1]
  %v44 = vld [vmem:[%s0] sm:$0xff]
  %v45 = vld [vmem:[%s4] sm:$0xff]
  %vm46 = vcmask 64512
  %v48 = vsel %vm46, %v45, 0
  %50 = vmatprep.subr.mxu0 0.0
  %51 = vmatpush1.msra.mxu0 %v44
  %52 = vmatprep.subr.mxu0 0.0
  %53 = vmatpush1.msra.mxu0 0.0
  %54 = vmatprep.subr.mxu0 0.0
  %55 = vmatpush1.msra.mxu0 0.0
  %56 = vmatprep.subr.mxu0 0.0
  %57 = vmatpush1.msra.mxu0 0.0
  %58 = vmatprep.subr.mxu0 0.0
  %59 = vmatpush1.msra.mxu0 0.0
  %60 = vmatprep.subr.mxu0 0.0
  %61 = vmatpush1.msra.mxu0 0.0
  %62 = vmatprep.subr.mxu0 0.0
  %63 = vmatpush1.msra.mxu0 0.0
  %64 = vmatprep.subr.mxu0 0.0
  %65 = vmatpush1.msra.mxu0 0.0
  %66 = vmatprep.subr.mxu0 0.0
  %67 = vmatpush1.msra.mxu0 0.0
  %68 = vmatprep.subr.mxu0 0.0
  %69 = vmatpush1.msra.mxu0 0.0
  %70 = vmatprep.subr.mxu0 0.0
  %71 = vmatpush1.msra.mxu0 0.0
  %72 = vmatprep.subr.mxu0 0.0
  %73 = vmatpush1.msra.mxu0 0.0
  %74 = vmatprep.subr.mxu0 0.0
  %75 = vmatpush1.msra.mxu0 0.0
  %76 = vmatprep.subr.mxu0 0.0
  %77 = vmatpush1.msra.mxu0 0.0
  %78 = vmatprep.subr.mxu0 0.0
  %79 = vmatpush1.msra.mxu0 0.0
  %80 = vmatprep.subr.mxu0 0.0
  %81 = vmatpush1.msra.mxu0 0.0
  %82 = vmatprep.subr.mxu0 0.0
  %83 = vmatpush1.msra.mxu0 0.0
  %84 = vmatprep.subr.mxu0 0.0
  %85 = vmatpush1.msra.mxu0 0.0
  %86 = vmatprep.subr.mxu0 0.0
  %87 = vmatpush1.msra.mxu0 0.0
  %88 = vmatprep.subr.mxu0 0.0
  %89 = vmatpush1.msra.mxu0 0.0
  %90 = vmatprep.subr.mxu0 0.0
  %91 = vmatpush1.msra.mxu0 0.0
  %92 = vmatprep.subr.mxu0 0.0
  %93 = vmatpush1.msra.mxu0 0.0
  %94 = vmatprep.subr.mxu0 0.0
  %95 = vmatpush1.msra.mxu0 0.0
  %96 = vmatprep.subr.mxu0 0.0
  %97 = vmatpush1.msra.mxu0 0.0
  %98 = vmatprep.subr.mxu0 0.0
  %99 = vmatpush1.msra.mxu0 0.0
  %100 = vmatprep.subr.mxu0 0.0
  %101 = vmatpush1.msra.mxu0 0.0
  %102 = vmatprep.subr.mxu0 0.0
  %103 = vmatpush1.msra.mxu0 0.0
  %104 = vmatprep.subr.mxu0 0.0
  %105 = vmatpush1.msra.mxu0 0.0
  %106 = vmatprep.subr.mxu0 0.0
  %107 = vmatpush1.msra.mxu0 0.0
  %108 = vmatprep.subr.mxu0 0.0
  %109 = vmatpush1.msra.mxu0 0.0
  %110 = vmatprep.subr.mxu0 0.0
  %111 = vmatpush1.msra.mxu0 0.0
  %112 = vmatprep.subr.mxu0 0.0
  %113 = vmatpush1.msra.mxu0 0.0
  %114 = vmatprep.mubr.f32.mxu0 0.0
  %115 = vmatmul.mubr.f32.gmra.mrb[0].mxu0 %v48
  %v116 = vpop.f32.mrb[0].mxu0
  %v117 = vadd.f32 0.0, %v116
  %v118 = vpop.f32.mrb[0].mxu0
  %119 = vdwg.mxu0
  %s120 = scalar_lea.vmem %s4, 8
  %v121 = vld [vmem:[%s120] sm:$0xff]
  %v123 = vsel %vm46, %v121, 0
  %125 = vmatprep.subr.mxu0 0.0
  %126 = vmatpush1.msra.mxu0 %v44
  %127 = vmatprep.subr.mxu0 0.0
  %128 = vmatpush1.msra.mxu0 0.0
  %129 = vmatprep.subr.mxu0 0.0
  %130 = vmatpush1.msra.mxu0 0.0
  %131 = vmatprep.subr.mxu0 0.0
  %132 = vmatpush1.msra.mxu0 0.0
  %133 = vmatprep.subr.mxu0 0.0
  %134 = vmatpush1.msra.mxu0 0.0
  %135 = vmatprep.subr.mxu0 0.0
  %136 = vmatpush1.msra.mxu0 0.0
  %137 = vmatprep.subr.mxu0 0.0
  %138 = vmatpush1.msra.mxu0 0.0
  %139 = vmatprep.subr.mxu0 0.0
  %140 = vmatpush1.msra.mxu0 0.0
  %141 = vmatprep.subr.mxu0 0.0
  %142 = vmatpush1.msra.mxu0 0.0
  %143 = vmatprep.subr.mxu0 0.0
  %144 = vmatpush1.msra.mxu0 0.0
  %145 = vmatprep.subr.mxu0 0.0
  %146 = vmatpush1.msra.mxu0 0.0
  %147 = vmatprep.subr.mxu0 0.0
  %148 = vmatpush1.msra.mxu0 0.0
  %149 = vmatprep.subr.mxu0 0.0
  %150 = vmatpush1.msra.mxu0 0.0
  %151 = vmatprep.subr.mxu0 0.0
  %152 = vmatpush1.msra.mxu0 0.0
  %153 = vmatprep.subr.mxu0 0.0
  %154 = vmatpush1.msra.mxu0 0.0
  %155 = vmatprep.subr.mxu0 0.0
  %156 = vmatpush1.msra.mxu0 0.0
  %157 = vmatprep.subr.mxu0 0.0
  %158 = vmatpush1.msra.mxu0 0.0
  %159 = vmatprep.subr.mxu0 0.0
  %160 = vmatpush1.msra.mxu0 0.0
  %161 = vmatprep.subr.mxu0 0.0
  %162 = vmatpush1.msra.mxu0 0.0
  %163 = vmatprep.subr.mxu0 0.0
  %164 = vmatpush1.msra.mxu0 0.0
  %165 = vmatprep.subr.mxu0 0.0
  %166 = vmatpush1.msra.mxu0 0.0
  %167 = vmatprep.subr.mxu0 0.0
  %168 = vmatpush1.msra.mxu0 0.0
  %169 = vmatprep.subr.mxu0 0.0
  %170 = vmatpush1.msra.mxu0 0.0
  %171 = vmatprep.subr.mxu0 0.0
  %172 = vmatpush1.msra.mxu0 0.0
  %173 = vmatprep.subr.mxu0 0.0
  %174 = vmatpush1.msra.mxu0 0.0
  %175 = vmatprep.subr.mxu0 0.0
  %176 = vmatpush1.msra.mxu0 0.0
  %177 = vmatprep.subr.mxu0 0.0
  %178 = vmatpush1.msra.mxu0 0.0
  %179 = vmatprep.subr.mxu0 0.0
  %180 = vmatpush1.msra.mxu0 0.0
  %181 = vmatprep.subr.mxu0 0.0
  %182 = vmatpush1.msra.mxu0 0.0
  %183 = vmatprep.subr.mxu0 0.0
  %184 = vmatpush1.msra.mxu0 0.0
  %185 = vmatprep.subr.mxu0 0.0
  %186 = vmatpush1.msra.mxu0 0.0
  %187 = vmatprep.subr.mxu0 0.0
  %188 = vmatpush1.msra.mxu0 0.0
  %189 = vmatprep.mubr.f32.mxu0 0.0
  %190 = vmatmul.mubr.f32.gmra.mrb[0].mxu0 %v123
  %v191 = vpop.f32.mrb[0].mxu0
  %v192 = vadd.f32 0.0, %v191
  %v193 = vpop.f32.mrb[0].mxu0
  %194 = vdwg.mxu0
  %s195 = scalar_lea.vmem %s4, 16
  %v196 = vld [vmem:[%s195] sm:$0xff]
  %v198 = vsel %vm46, %v196, 0
  %200 = vmatprep.subr.mxu0 0.0
  %201 = vmatpush1.msra.mxu0 %v44
  %202 = vmatprep.subr.mxu0 0.0
  %203 = vmatpush1.msra.mxu0 0.0
  %204 = vmatprep.subr.mxu0 0.0
  %205 = vmatpush1.msra.mxu0 0.0
  %206 = vmatprep.subr.mxu0 0.0
  %207 = vmatpush1.msra.mxu0 0.0
  %208 = vmatprep.subr.mxu0 0.0
  %209 = vmatpush1.msra.mxu0 0.0
  %210 = vmatprep.subr.mxu0 0.0
  %211 = vmatpush1.msra.mxu0 0.0
  %212 = vmatprep.subr.mxu0 0.0
  %213 = vmatpush1.msra.mxu0 0.0
  %214 = vmatprep.subr.mxu0 0.0
  %215 = vmatpush1.msra.mxu0 0.0
  %216 = vmatprep.subr.mxu0 0.0
  %217 = vmatpush1.msra.mxu0 0.0
  %218 = vmatprep.subr.mxu0 0.0
  %219 = vmatpush1.msra.mxu0 0.0
  %220 = vmatprep.subr.mxu0 0.0
  %221 = vmatpush1.msra.mxu0 0.0
  %222 = vmatprep.subr.mxu0 0.0
  %223 = vmatpush1.msra.mxu0 0.0
  %224 = vmatprep.subr.mxu0 0.0
  %225 = vmatpush1.msra.mxu0 0.0
  %226 = vmatprep.subr.mxu0 0.0
  %227 = vmatpush1.msra.mxu0 0.0
  %228 = vmatprep.subr.mxu0 0.0
  %229 = vmatpush1.msra.mxu0 0.0
  %230 = vmatprep.subr.mxu0 0.0
  %231 = vmatpush1.msra.mxu0 0.0
  %232 = vmatprep.subr.mxu0 0.0
  %233 = vmatpush1.msra.mxu0 0.0
  %234 = vmatprep.subr.mxu0 0.0
  %235 = vmatpush1.msra.mxu0 0.0
  %236 = vmatprep.subr.mxu0 0.0
  %237 = vmatpush1.msra.mxu0 0.0
  %238 = vmatprep.subr.mxu0 0.0
  %239 = vmatpush1.msra.mxu0 0.0
  %240 = vmatprep.subr.mxu0 0.0
  %241 = vmatpush1.msra.mxu0 0.0
  %242 = vmatprep.subr.mxu0 0.0
  %243 = vmatpush1.msra.mxu0 0.0
  %244 = vmatprep.subr.mxu0 0.0
  %245 = vmatpush1.msra.mxu0 0.0
  %246 = vmatprep.subr.mxu0 0.0
  %247 = vmatpush1.msra.mxu0 0.0
  %248 = vmatprep.subr.mxu0 0.0
  %249 = vmatpush1.msra.mxu0 0.0
  %250 = vmatprep.subr.mxu0 0.0
  %251 = vmatpush1.msra.mxu0 0.0
  %252 = vmatprep.subr.mxu0 0.0
  %253 = vmatpush1.msra.mxu0 0.0
  %254 = vmatprep.subr.mxu0 0.0
  %255 = vmatpush1.msra.mxu0 0.0
  %256 = vmatprep.subr.mxu0 0.0
  %257 = vmatpush1.msra.mxu0 0.0
  %258 = vmatprep.subr.mxu0 0.0
  %259 = vmatpush1.msra.mxu0 0.0
  %260 = vmatprep.subr.mxu0 0.0
  %261 = vmatpush1.msra.mxu0 0.0
  %262 = vmatprep.subr.mxu0 0.0
  %263 = vmatpush1.msra.mxu0 0.0
  %264 = vmatprep.mubr.f32.mxu0 0.0
  %265 = vmatmul.mubr.f32.gmra.mrb[0].mxu0 %v198
  %v266 = vpop.f32.mrb[0].mxu0
  %v267 = vadd.f32 0.0, %v266
  %v268 = vpop.f32.mrb[0].mxu0
  %269 = vdwg.mxu0
  %270 = vrot.lane.b32.xlu0 %v117, 1
  %v271 = vpop.permute.xlu0 %270
  %v273 = vlaneseq
  %v274 = vshrl.u32 %v273, 7
  %v275 = vsub.s32 0, %v274
  %v276 = vrot.slane %v41, %v275
  %v278 = vmul.f32 %v271, %v276
  %279 = vrot.lane.b32.xlu0 %v267, 127
  %v280 = vpop.permute.xlu0 %279
  %v282 = vlaneseq
  %v283 = vshrl.u32 %v282, 7
  %v284 = vsub.s32 0, %v283
  %v285 = vrot.slane %v42, %v284
  %v287 = vmul.f32 %v280, %v285
  %v288 = vadd.f32 %v278, %v192
  %v289 = vadd.f32 %v288, %v287
  %v290 = vld [vmem:[%s5] sm:$0xff]
  %292 = vset.pattern.permute.xlu0 0
  %293 = vperm.xlu0 %292, %v290
  %v294 = vpop.permute.xlu0 %293
  %v296 = vadd.f32 %v289, %v294
  %v298 = vlaneseq
  %v299 = vshrl.u32 %v298, 7
  %v300 = vsub.s32 0, %v299
  %v301 = vrot.slane %v43, %v300
  %v303 = vmul.f32 %v296, %v301
  %304 = vadd.xlane.f32.xlu0 %v303
  %v305 = vpop.xlane.xlu0 %304
  %v306 = vmul.f32 %v303, %v303
  %307 = vadd.xlane.f32.xlu0 %v306
  %v308 = vpop.xlane.xlu0 %307
  %v309 = vmul.f32 %v305, 0.03125
  %v310 = vmul.f32 %v308, 0.03125
  %v311 = vmul.f32 %v309, %v309
  %v312 = vsub.f32 %v310, %v311
  %v313 = vmax.f32 %v312, 0.0
  %v314 = vadd.f32 %v313, 1e-05
  %v315 = vrsqrt.pop %v314
  %v316 = vld [vmem:[%s6] sm:$0xff]
  %v317 = vmul.f32 %v315, %v316
  %v318 = vsub.f32 %v296, %v309
  %320 = vset.pattern.permute.xlu0 0
  %321 = vperm.xlu0 %320, %v317
  %v322 = vpop.permute.xlu0 %321
  %v324 = vmul.f32 %v318, %v322
  %v325 = vld [vmem:[%s7] sm:$0xff]
  %327 = vset.pattern.permute.xlu0 0
  %328 = vperm.xlu0 %327, %v325
  %v329 = vpop.permute.xlu0 %328
  %v331 = vadd.f32 %v324, %v329
  %v332 = vmax.f32 %v331, 0.0
  %v333 = vld [vmem:[%s8] sm:$0xff]
  %v335 = vsel %vm46, %v333, 0
  %337 = vmatprep.subr.mxu0 0.0
  %338 = vmatpush1.msra.mxu0 %v332
  %339 = vmatprep.subr.mxu0 0.0
  %340 = vmatpush1.msra.mxu0 0.0
  %341 = vmatprep.subr.mxu0 0.0
  %342 = vmatpush1.msra.mxu0 0.0
  %343 = vmatprep.subr.mxu0 0.0
  %344 = vmatpush1.msra.mxu0 0.0
  %345 = vmatprep.subr.mxu0 0.0
  %346 = vmatpush1.msra.mxu0 0.0
  %347 = vmatprep.subr.mxu0 0.0
  %348 = vmatpush1.msra.mxu0 0.0
  %349 = vmatprep.subr.mxu0 0.0
  %350 = vmatpush1.msra.mxu0 0.0
  %351 = vmatprep.subr.mxu0 0.0
  %352 = vmatpush1.msra.mxu0 0.0
  %353 = vmatprep.subr.mxu0 0.0
  %354 = vmatpush1.msra.mxu0 0.0
  %355 = vmatprep.subr.mxu0 0.0
  %356 = vmatpush1.msra.mxu0 0.0
  %357 = vmatprep.subr.mxu0 0.0
  %358 = vmatpush1.msra.mxu0 0.0
  %359 = vmatprep.subr.mxu0 0.0
  %360 = vmatpush1.msra.mxu0 0.0
  %361 = vmatprep.subr.mxu0 0.0
  %362 = vmatpush1.msra.mxu0 0.0
  %363 = vmatprep.subr.mxu0 0.0
  %364 = vmatpush1.msra.mxu0 0.0
  %365 = vmatprep.subr.mxu0 0.0
  %366 = vmatpush1.msra.mxu0 0.0
  %367 = vmatprep.subr.mxu0 0.0
  %368 = vmatpush1.msra.mxu0 0.0
  %369 = vmatprep.subr.mxu0 0.0
  %370 = vmatpush1.msra.mxu0 0.0
  %371 = vmatprep.subr.mxu0 0.0
  %372 = vmatpush1.msra.mxu0 0.0
  %373 = vmatprep.subr.mxu0 0.0
  %374 = vmatpush1.msra.mxu0 0.0
  %375 = vmatprep.subr.mxu0 0.0
  %376 = vmatpush1.msra.mxu0 0.0
  %377 = vmatprep.subr.mxu0 0.0
  %378 = vmatpush1.msra.mxu0 0.0
  %379 = vmatprep.subr.mxu0 0.0
  %380 = vmatpush1.msra.mxu0 0.0
  %381 = vmatprep.subr.mxu0 0.0
  %382 = vmatpush1.msra.mxu0 0.0
  %383 = vmatprep.subr.mxu0 0.0
  %384 = vmatpush1.msra.mxu0 0.0
  %385 = vmatprep.subr.mxu0 0.0
  %386 = vmatpush1.msra.mxu0 0.0
  %387 = vmatprep.subr.mxu0 0.0
  %388 = vmatpush1.msra.mxu0 0.0
  %389 = vmatprep.subr.mxu0 0.0
  %390 = vmatpush1.msra.mxu0 0.0
  %391 = vmatprep.subr.mxu0 0.0
  %392 = vmatpush1.msra.mxu0 0.0
  %393 = vmatprep.subr.mxu0 0.0
  %394 = vmatpush1.msra.mxu0 0.0
  %395 = vmatprep.subr.mxu0 0.0
  %396 = vmatpush1.msra.mxu0 0.0
  %397 = vmatprep.subr.mxu0 0.0
  %398 = vmatpush1.msra.mxu0 0.0
  %399 = vmatprep.subr.mxu0 0.0
  %400 = vmatpush1.msra.mxu0 0.0
  %401 = vmatprep.mubr.f32.mxu0 0.0
  %402 = vmatmul.mubr.f32.gmra.mrb[0].mxu0 %v335
  %v403 = vpop.f32.mrb[0].mxu0
  %v404 = vadd.f32 0.0, %v403
  %v405 = vpop.f32.mrb[0].mxu0
  %406 = vdwg.mxu0
  %s407 = scalar_lea.vmem %s8, 8
  %v408 = vld [vmem:[%s407] sm:$0xff]
  %v410 = vsel %vm46, %v408, 0
  %412 = vmatprep.subr.mxu0 0.0
  %413 = vmatpush1.msra.mxu0 %v332
  %414 = vmatprep.subr.mxu0 0.0
  %415 = vmatpush1.msra.mxu0 0.0
  %416 = vmatprep.subr.mxu0 0.0
  %417 = vmatpush1.msra.mxu0 0.0
  %418 = vmatprep.subr.mxu0 0.0
  %419 = vmatpush1.msra.mxu0 0.0
  %420 = vmatprep.subr.mxu0 0.0
  %421 = vmatpush1.msra.mxu0 0.0
  %422 = vmatprep.subr.mxu0 0.0
  %423 = vmatpush1.msra.mxu0 0.0
  %424 = vmatprep.subr.mxu0 0.0
  %425 = vmatpush1.msra.mxu0 0.0
  %426 = vmatprep.subr.mxu0 0.0
  %427 = vmatpush1.msra.mxu0 0.0
  %428 = vmatprep.subr.mxu0 0.0
  %429 = vmatpush1.msra.mxu0 0.0
  %430 = vmatprep.subr.mxu0 0.0
  %431 = vmatpush1.msra.mxu0 0.0
  %432 = vmatprep.subr.mxu0 0.0
  %433 = vmatpush1.msra.mxu0 0.0
  %434 = vmatprep.subr.mxu0 0.0
  %435 = vmatpush1.msra.mxu0 0.0
  %436 = vmatprep.subr.mxu0 0.0
  %437 = vmatpush1.msra.mxu0 0.0
  %438 = vmatprep.subr.mxu0 0.0
  %439 = vmatpush1.msra.mxu0 0.0
  %440 = vmatprep.subr.mxu0 0.0
  %441 = vmatpush1.msra.mxu0 0.0
  %442 = vmatprep.subr.mxu0 0.0
  %443 = vmatpush1.msra.mxu0 0.0
  %444 = vmatprep.subr.mxu0 0.0
  %445 = vmatpush1.msra.mxu0 0.0
  %446 = vmatprep.subr.mxu0 0.0
  %447 = vmatpush1.msra.mxu0 0.0
  %448 = vmatprep.subr.mxu0 0.0
  %449 = vmatpush1.msra.mxu0 0.0
  %450 = vmatprep.subr.mxu0 0.0
  %451 = vmatpush1.msra.mxu0 0.0
  %452 = vmatprep.subr.mxu0 0.0
  %453 = vmatpush1.msra.mxu0 0.0
  %454 = vmatprep.subr.mxu0 0.0
  %455 = vmatpush1.msra.mxu0 0.0
  %456 = vmatprep.subr.mxu0 0.0
  %457 = vmatpush1.msra.mxu0 0.0
  %458 = vmatprep.subr.mxu0 0.0
  %459 = vmatpush1.msra.mxu0 0.0
  %460 = vmatprep.subr.mxu0 0.0
  %461 = vmatpush1.msra.mxu0 0.0
  %462 = vmatprep.subr.mxu0 0.0
  %463 = vmatpush1.msra.mxu0 0.0
  %464 = vmatprep.subr.mxu0 0.0
  %465 = vmatpush1.msra.mxu0 0.0
  %466 = vmatprep.subr.mxu0 0.0
  %467 = vmatpush1.msra.mxu0 0.0
  %468 = vmatprep.subr.mxu0 0.0
  %469 = vmatpush1.msra.mxu0 0.0
  %470 = vmatprep.subr.mxu0 0.0
  %471 = vmatpush1.msra.mxu0 0.0
  %472 = vmatprep.subr.mxu0 0.0
  %473 = vmatpush1.msra.mxu0 0.0
  %474 = vmatprep.subr.mxu0 0.0
  %475 = vmatpush1.msra.mxu0 0.0
  %476 = vmatprep.mubr.f32.mxu0 0.0
  %477 = vmatmul.mubr.f32.gmra.mrb[0].mxu0 %v410
  %v478 = vpop.f32.mrb[0].mxu0
  %v479 = vadd.f32 0.0, %v478
  %v480 = vpop.f32.mrb[0].mxu0
  %481 = vdwg.mxu0
  %s482 = scalar_lea.vmem %s8, 16
  %v483 = vld [vmem:[%s482] sm:$0xff]
  %v485 = vsel %vm46, %v483, 0
  %487 = vmatprep.subr.mxu0 0.0
  %488 = vmatpush1.msra.mxu0 %v332
  %489 = vmatprep.subr.mxu0 0.0
  %490 = vmatpush1.msra.mxu0 0.0
  %491 = vmatprep.subr.mxu0 0.0
  %492 = vmatpush1.msra.mxu0 0.0
  %493 = vmatprep.subr.mxu0 0.0
  %494 = vmatpush1.msra.mxu0 0.0
  %495 = vmatprep.subr.mxu0 0.0
  %496 = vmatpush1.msra.mxu0 0.0
  %497 = vmatprep.subr.mxu0 0.0
  %498 = vmatpush1.msra.mxu0 0.0
  %499 = vmatprep.subr.mxu0 0.0
  %500 = vmatpush1.msra.mxu0 0.0
  %501 = vmatprep.subr.mxu0 0.0
  %502 = vmatpush1.msra.mxu0 0.0
  %503 = vmatprep.subr.mxu0 0.0
  %504 = vmatpush1.msra.mxu0 0.0
  %505 = vmatprep.subr.mxu0 0.0
  %506 = vmatpush1.msra.mxu0 0.0
  %507 = vmatprep.subr.mxu0 0.0
  %508 = vmatpush1.msra.mxu0 0.0
  %509 = vmatprep.subr.mxu0 0.0
  %510 = vmatpush1.msra.mxu0 0.0
  %511 = vmatprep.subr.mxu0 0.0
  %512 = vmatpush1.msra.mxu0 0.0
  %513 = vmatprep.subr.mxu0 0.0
  %514 = vmatpush1.msra.mxu0 0.0
  %515 = vmatprep.subr.mxu0 0.0
  %516 = vmatpush1.msra.mxu0 0.0
  %517 = vmatprep.subr.mxu0 0.0
  %518 = vmatpush1.msra.mxu0 0.0
  %519 = vmatprep.subr.mxu0 0.0
  %520 = vmatpush1.msra.mxu0 0.0
  %521 = vmatprep.subr.mxu0 0.0
  %522 = vmatpush1.msra.mxu0 0.0
  %523 = vmatprep.subr.mxu0 0.0
  %524 = vmatpush1.msra.mxu0 0.0
  %525 = vmatprep.subr.mxu0 0.0
  %526 = vmatpush1.msra.mxu0 0.0
  %527 = vmatprep.subr.mxu0 0.0
  %528 = vmatpush1.msra.mxu0 0.0
  %529 = vmatprep.subr.mxu0 0.0
  %530 = vmatpush1.msra.mxu0 0.0
  %531 = vmatprep.subr.mxu0 0.0
  %532 = vmatpush1.msra.mxu0 0.0
  %533 = vmatprep.subr.mxu0 0.0
  %534 = vmatpush1.msra.mxu0 0.0
  %535 = vmatprep.subr.mxu0 0.0
  %536 = vmatpush1.msra.mxu0 0.0
  %537 = vmatprep.subr.mxu0 0.0
  %538 = vmatpush1.msra.mxu0 0.0
  %539 = vmatprep.subr.mxu0 0.0
  %540 = vmatpush1.msra.mxu0 0.0
  %541 = vmatprep.subr.mxu0 0.0
  %542 = vmatpush1.msra.mxu0 0.0
  %543 = vmatprep.subr.mxu0 0.0
  %544 = vmatpush1.msra.mxu0 0.0
  %545 = vmatprep.subr.mxu0 0.0
  %546 = vmatpush1.msra.mxu0 0.0
  %547 = vmatprep.subr.mxu0 0.0
  %548 = vmatpush1.msra.mxu0 0.0
  %549 = vmatprep.subr.mxu0 0.0
  %550 = vmatpush1.msra.mxu0 0.0
  %551 = vmatprep.mubr.f32.mxu0 0.0
  %552 = vmatmul.mubr.f32.gmra.mrb[0].mxu0 %v485
  %v553 = vpop.f32.mrb[0].mxu0
  %v554 = vadd.f32 0.0, %v553
  %v555 = vpop.f32.mrb[0].mxu0
  %556 = vdwg.mxu0
  %557 = vrot.lane.b32.xlu0 %v404, 1
  %v558 = vpop.permute.xlu0 %557
  %v559 = vmul.f32 %v558, %v276
  %560 = vrot.lane.b32.xlu0 %v554, 127
  %v561 = vpop.permute.xlu0 %560
  %v562 = vmul.f32 %v561, %v285
  %v563 = vadd.f32 %v559, %v479
  %v564 = vadd.f32 %v563, %v562
  %v565 = vld [vmem:[%s9] sm:$0xff]
  %567 = vset.pattern.permute.xlu0 0
  %568 = vperm.xlu0 %567, %v565
  %v569 = vpop.permute.xlu0 %568
  %v571 = vadd.f32 %v564, %v569
  %v572 = vmul.f32 %v571, %v301
  %573 = vadd.xlane.f32.xlu0 %v572
  %v574 = vpop.xlane.xlu0 %573
  %v575 = vmul.f32 %v572, %v572
  %576 = vadd.xlane.f32.xlu0 %v575
  %v577 = vpop.xlane.xlu0 %576
  %v578 = vmul.f32 %v574, 0.03125
  %v579 = vmul.f32 %v577, 0.03125
  %v580 = vmul.f32 %v578, %v578
  %v581 = vsub.f32 %v579, %v580
  %v582 = vmax.f32 %v581, 0.0
  %v583 = vadd.f32 %v582, 1e-05
  %v584 = vrsqrt.pop %v583
  %v585 = vld [vmem:[%s10] sm:$0xff]
  %v586 = vmul.f32 %v584, %v585
  %v587 = vsub.f32 %v571, %v578
  %589 = vset.pattern.permute.xlu0 0
  %590 = vperm.xlu0 %589, %v586
  %v591 = vpop.permute.xlu0 %590
  %v593 = vmul.f32 %v587, %v591
  %v594 = vld [vmem:[%s11] sm:$0xff]
  %596 = vset.pattern.permute.xlu0 0
  %597 = vperm.xlu0 %596, %v594
  %v598 = vpop.permute.xlu0 %597
  %v600 = vadd.f32 %v593, %v598
  %v601 = vadd.f32 %v600, %v44
  %v602 = vmax.f32 %v601, 0.0
  %603 = vst [vmem:[%s12] sm:$0xff] %v602
  // Predicated region
  $region50: #{residual_block.1} parent=0 // pred_check
    _
  $region51: #{residual_block.1} parent=0 // pred_check_branch
    %605 = sbr.rel (0) target = $region53
  $region52: #{residual_block.1} parent=0 // pred_region
    _
  $region53: #{residual_block.1} parent=0 // pred_fallthru
    _
  // Predicated region
  $region54: #{residual_block.1} parent=0 // pred_check
    _
  $region55: #{residual_block.1} parent=0 // pred_check_branch
    %607 = sbr.rel (0) target = $region57
  $region56: #{residual_block.1} parent=0 // pred_region
    _
  $region57: #{residual_block.1} parent=0 // pred_fallthru
    _

</llo_original>
